<compile_context>
chip_gen: v5e
topology: v5e:2x2
jax: 0.10.0
libtpu: 0.0.40
codegen_flags: <defaults>
</compile_context>

<pallas_src>
import jax
import jax.numpy as jnp
from jax.experimental import pallas as pl
from jax.experimental.pallas import tpu as pltpu

LEAK = 0.01      # nn.LeakyReLU default negative_slope
BN_EPS = 1e-5    # nn.BatchNorm2d default eps
POOL_T = 8       # self.pool in the module


def _leaky(x):
    return jnp.where(x > 0, x, LEAK * x)


def _pool_matrix(pool, l_out, l_in):
    """(l_in, l_out) matrix implementing AvgPool1d(kernel=stride=pool, floor)."""
    rows = jnp.arange(l_in)[:, None]
    cols = jnp.arange(l_out)[None, :]
    m = ((rows // pool == cols) & (rows < l_out * pool)).astype(jnp.float32)
    return m / float(pool)


# ---------------- Host-side matrix construction --------------------------------
def _build_stage1(w_list, b_list, T, pool_t):
    """Banded Toeplitz conv matrix, bias row, and pooling matrix for all 3 branches.

    Column ordering is (filter f major, then branch, then time) so that the
    pooled feature columns match torch.cat([T1, T2, T3], dim=-1) per filter —
    this also makes the stage-2 pooling windows correctly span branch
    boundaries (as AvgPool2d on the concatenated time axis does)."""
    num_T = w_list[0].shape[0]
    t_outs = [T - int(w.shape[1]) + 1 for w in w_list]
    l_outs = [t // pool_t for t in t_outs]
    T_sum, L_total = sum(t_outs), sum(l_outs)
    N1 = num_T * T_sum
    W_all = jnp.zeros((T, N1), jnp.float32)
    b1 = jnp.zeros((N1,), jnp.float32)
    P1 = jnp.zeros((N1, num_T * L_total), jnp.float32)
    off_t = off_l = 0
    for w, b, t_out, l_out in zip(w_list, b_list, t_outs, l_outs):
        k = int(w.shape[1])
        f = jnp.arange(num_T)
        t = jnp.arange(t_out)
        j = jnp.arange(k)
        cols = f[:, None] * T_sum + off_t + t[None, :]                   # (F, t_out)
        rows = t[:, None] + j[None, :]                                   # (t_out, k)
        rr = jnp.broadcast_to(rows[None], (num_T, t_out, k)).reshape(-1)
        cc = jnp.broadcast_to(cols[:, :, None], (num_T, t_out, k)).reshape(-1)
        vv = jnp.broadcast_to(w[:, None, :], (num_T, t_out, k)).reshape(-1)
        W_all = W_all.at[rr, cc].set(vv)
        b1 = b1.at[cols.reshape(-1)].set(
            jnp.broadcast_to(b[:, None], (num_T, t_out)).reshape(-1))
        tp = l_out * pool_t                       # AvgPool floor-truncates the tail
        src = (f[:, None] * T_sum + off_t + jnp.arange(tp)[None, :]).reshape(-1)
        dst = (f[:, None] * L_total + off_l
               + (jnp.arange(tp) // pool_t)[None, :]).reshape(-1)
        P1 = P1.at[src, dst].set(1.0 / pool_t)
        off_t += t_out
        off_l += l_out
    return W_all, b1[None, :], P1, L_total


def _build_stage2(w_s, b_s, scale, shift, L_total, pool_s):
    """BatchNorm folded into the 1x1 Sception conv, plus its pooling matrix."""
    num_S = w_s.shape[0]
    w_eff = w_s * scale[None, :]                     # fold BN scale into weights
    b_eff = b_s + w_s @ shift                        # fold BN shift into bias
    W2 = jnp.kron(w_eff.T, jnp.eye(L_total, dtype=jnp.float32))   # (F*L, S*L)
    b2 = jnp.repeat(b_eff, L_total)[None, :]                       # (1, S*L)
    l_out = L_total // pool_s
    P2 = jnp.kron(jnp.eye(num_S, dtype=jnp.float32),
                  _pool_matrix(pool_s, l_out, L_total))            # (S*L, S*l_out)
    return W2, b2, P2, l_out


# ---------------- Fused TCNN1D kernel ------------------------------------------
def _tcnn1d_kernel(x_ref, wall_ref, b1_ref, p1_ref, w2_ref, b2_ref, p2_ref, o_ref):
    x = x_ref[0]                                                   # (rows, T)
    # Tception1/2/3: all temporal convs as one banded-Toeplitz matmul on the MXU,
    # then bias + LeakyReLU on the VPU, then the AvgPool as a second matmul.
    conv = jnp.dot(x, wall_ref[...], preferred_element_type=jnp.float32)
    conv = _leaky(conv + b1_ref[...])
    feat = jnp.dot(conv, p1_ref[...], preferred_element_type=jnp.float32)
    # BN_t (folded) + Sception 1x1 conv (kron(w', I_L) matmul) + LeakyReLU + pool.
    z = jnp.dot(feat, w2_ref[...], preferred_element_type=jnp.float32)
    z = _leaky(z + b2_ref[...])
    o_ref[0] = jnp.dot(z, p2_ref[...], preferred_element_type=jnp.float32)


def _pick_grid(B, C):
    # Aim for >=8 sublane rows per grid step, but keep the grid extent >=2 when
    # the batch allows it (v7x has 2 TensorCores; grid of 1 idles one of them).
    bt = max(1, -(-8 // max(C, 1)))          # ceil(8 / C) batch elems per step
    g = max(1, B // bt)
    if g < 2 <= B:
        g = 2
    while B % g:
        g -= 1
    return g


def tcnn1d_forward(x_nchw, params, pool_t=POOL_T):
    """x_nchw: (B, 1, C_eeg, T) PyTorch layout.  hidden / dropout_rate are unused
    by TCNN1D.forward, exactly as in the reference module."""
    B, _, C, T = x_nchw.shape
    pool_s = int(pool_t * 0.25)
    if pool_s < 1:
        raise ValueError("pool_t * 0.25 must be >= 1 for the Sception AvgPool.")
    w_list = [params[f"w_t{i}"] for i in (1, 2, 3)]
    b_list = [params[f"b_t{i}"] for i in (1, 2, 3)]
    num_S = params["w_s"].shape[0]

    scale = params["bn_gamma"] / jnp.sqrt(params["bn_var"] + BN_EPS)
    shift = params["bn_beta"] - params["bn_mean"] * scale
    W_all, b1, P1, L_total = _build_stage1(w_list, b_list, T, pool_t)
    W2, b2, P2, l_out = _build_stage2(params["w_s"], params["b_s"], scale, shift,
                                      L_total, pool_s)

    G = _pick_grid(B, C)
    rows = (B // G) * C
    x_rows = x_nchw[:, 0].reshape(G, rows, T)
    out_cols = num_S * l_out

    # Constant-index blocks (weights / pooling matrices) stay resident in VMEM
    # across grid steps; block shapes equal the full array dims.
    def const(shape):
        return pl.BlockSpec(shape, lambda i, _n=len(shape): (0,) * _n)

    out = pl.pallas_call(
        _tcnn1d_kernel,
        out_shape=jax.ShapeDtypeStruct((G, rows, out_cols), jnp.float32),
        grid=(G,),
        in_specs=[
            pl.BlockSpec((1, rows, T), lambda i: (i, 0, 0)),
            const(W_all.shape), const(b1.shape), const(P1.shape),
            const(W2.shape), const(b2.shape), const(P2.shape),
        ],
        out_specs=pl.BlockSpec((1, rows, out_cols), lambda i: (i, 0, 0)),
        compiler_params=pltpu.CompilerParams(dimension_semantics=("parallel",)),
    )(x_rows, W_all, b1, P1, W2, b2, P2)

    out = out.reshape(B, C, num_S, l_out).transpose(0, 2, 1, 3)   # (B, S, C, l_out)
    if out.shape[1] == 1:                                         # torch .squeeze(1)
        out = jnp.squeeze(out, axis=1)
    return out


# ---------------- Parameters ----------------------------------------------------
def init_params(key, sampling_rate, num_T, num_S):
    ks = [int(w * sampling_rate) for w in (0.5, 0.25, 0.125)]
    keys = jax.random.split(key, 10)
    p = {}
    for i, k in enumerate(ks):
        p[f"w_t{i+1}"] = 0.3 * jax.random.normal(keys[2 * i], (num_T, k), jnp.float32)
        p[f"b_t{i+1}"] = 0.1 * jax.random.normal(keys[2 * i + 1], (num_T,), jnp.float32)
    p["w_s"] = 0.3 * jax.random.normal(keys[6], (num_S, num_T), jnp.float32)
    p["b_s"] = 0.1 * jax.random.normal(keys[7], (num_S,), jnp.float32)
    p["bn_gamma"] = 1.0 + 0.1 * jax.random.normal(keys[8], (num_T,), jnp.float32)
    p["bn_beta"] = 0.1 * jax.random.normal(keys[9], (num_T,), jnp.float32)
    # TODO(synk): BatchNorm2d is implemented in inference mode with fixed running
    # stats; training-mode batch statistics are not reproduced.
    p["bn_mean"] = jnp.zeros((num_T,), jnp.float32)
    p["bn_var"] = jnp.ones((num_T,), jnp.float32)
    return p


# ---------------- Pure-JAX reference for validation ------------------------------
def _ref_conv_block(x, w4, b, pool):
    y = jax.lax.conv_general_dilated(
        x, w4, window_strides=(1, 1), padding="VALID",
        dimension_numbers=("NCHW", "OIHW", "NCHW"),
        precision=jax.lax.Precision.HIGHEST)
    y = y + b[None, :, None, None]
    y = jnp.where(y > 0, y, LEAK * y)
    L = y.shape[-1] // pool
    y = y[..., : L * pool].reshape(y.shape[:-1] + (L, pool)).mean(-1)
    return y


def ref_forward(x_nchw, params, pool_t=POOL_T):
    outs = []
    for i in (1, 2, 3):
        w4 = params[f"w_t{i}"][:, None, None, :]
        outs.append(_ref_conv_block(x_nchw, w4, params[f"b_t{i}"], pool_t))
    feat = jnp.concatenate(outs, axis=-1)
    m, v = params["bn_mean"], params["bn_var"]
    g, be = params["bn_gamma"], params["bn_beta"]
    feat = (feat - m[None, :, None, None]) / jnp.sqrt(v + BN_EPS)[None, :, None, None]
    feat = feat * g[None, :, None, None] + be[None, :, None, None]
    out = _ref_conv_block(feat, params["w_s"][:, :, None, None], params["b_s"],
                          int(pool_t * 0.25))
    if out.shape[1] == 1:
        out = jnp.squeeze(out, axis=1)
    return out


if __name__ == "__main__":
    # Config consistent with TCNN1D: input_size=(1, 4, 64), sampling_rate=16
    # -> temporal kernels (8, 4, 2); num_T=4, num_S=3; hidden=32 and
    # dropout_rate=0.5 are unused by the forward pass.
    B, C_eeg, T = 2, 4, 64
    sampling_rate, num_T, num_S = 16, 4, 3

    key = jax.random.PRNGKey(0)
    kx, kp = jax.random.split(key)
    x = jax.random.normal(kx, (B, 1, C_eeg, T), jnp.float32)
    params = init_params(kp, sampling_rate, num_T, num_S)

    fwd = jax.jit(tcnn1d_forward)
    out = jax.block_until_ready(fwd(x, params))

    ref = ref_forward(x, params)
    assert out.shape == ref.shape, (out.shape, ref.shape)
    err = float(jnp.max(jnp.abs(out - ref)))
    # All-f32 pipeline: expected max-abs error ~1e-5; keep a tight bound.
    assert err < 5e-4, f"max abs error too large: {err}"
    print("KERNEL_OK")
</pallas_src>

<mosaic_0001>
module attributes {stable_mosaic.version = 11 : i64} {
  func.func @_tcnn1d_kernel(%arg0: i32, %arg1: memref<1x4x64xf32, #tpu.memory_space<vmem>>, %arg2: memref<64x724xf32, #tpu.memory_space<vmem>>, %arg3: memref<1x724xf32, #tpu.memory_space<vmem>>, %arg4: memref<724x84xf32, #tpu.memory_space<vmem>>, %arg5: memref<84x63xf32, #tpu.memory_space<vmem>>, %arg6: memref<1x63xf32, #tpu.memory_space<vmem>>, %arg7: memref<63x30xf32, #tpu.memory_space<vmem>>, %arg8: memref<1x4x30xf32, #tpu.memory_space<vmem>>) attributes {dimension_semantics = [#tpu.dimension_semantics<parallel>], iteration_bounds = array<i64: 2>, scalar_prefetch = 0 : i64, scratch_operands = 0 : i64, tpu.core_type = #tpu.core_type<tc>, window_params = [{transform_indices = @transform_0, window_bounds = array<i64: 1, 4, 64>}, {pipeline_mode = #tpu.pipeline_mode<synchronous>, transform_indices = @transform_1, window_bounds = array<i64: 64, 724>}, {pipeline_mode = #tpu.pipeline_mode<synchronous>, transform_indices = @transform_2, window_bounds = array<i64: 1, 724>}, {pipeline_mode = #tpu.pipeline_mode<synchronous>, transform_indices = @transform_3, window_bounds = array<i64: 724, 84>}, {pipeline_mode = #tpu.pipeline_mode<synchronous>, transform_indices = @transform_4, window_bounds = array<i64: 84, 63>}, {pipeline_mode = #tpu.pipeline_mode<synchronous>, transform_indices = @transform_5, window_bounds = array<i64: 1, 63>}, {pipeline_mode = #tpu.pipeline_mode<synchronous>, transform_indices = @transform_6, window_bounds = array<i64: 63, 30>}, {transform_indices = @transform_7, window_bounds = array<i64: 1, 4, 30>}]} {
    %c0 = arith.constant 0 : index
    %c0_0 = arith.constant 0 : index
    %c0_1 = arith.constant 0 : index
    %0 = vector.load %arg1[%c0, %c0_0, %c0_1] : memref<1x4x64xf32, #tpu.memory_space<vmem>>, vector<1x4x64xf32>
    %1 = vector.shape_cast %0 : vector<1x4x64xf32> to vector<4x64xf32>
    %c0_2 = arith.constant 0 : index
    %c0_3 = arith.constant 0 : index
    %2 = vector.load %arg2[%c0_2, %c0_3] : memref<64x724xf32, #tpu.memory_space<vmem>>, vector<64x724xf32>
    %cst = arith.constant dense<0.000000e+00> : vector<4x724xf32>
    %3 = tpu.matmul %1, %2, %cst {dimension_numbers = #tpu.dot_dimension_numbers<[1], [0], [0], [1], [0, 0, 1, 1], [], []>} : vector<4x64xf32>, vector<64x724xf32>, vector<4x724xf32> -> vector<4x724xf32>
    %c0_4 = arith.constant 0 : index
    %c0_5 = arith.constant 0 : index
    %4 = vector.load %arg3[%c0_4, %c0_5] : memref<1x724xf32, #tpu.memory_space<vmem>>, vector<1x724xf32>
    %5 = vector.broadcast %4 : vector<1x724xf32> to vector<4x724xf32>
    %6 = arith.addf %3, %5 : vector<4x724xf32>
    %cst_6 = arith.constant 0.000000e+00 : f32
    %7 = vector.broadcast %cst_6 : f32 to vector<4x724xf32>
    %8 = arith.cmpf ogt, %6, %7 : vector<4x724xf32>
    %cst_7 = arith.constant 0.00999999977 : f32
    %9 = vector.broadcast %cst_7 : f32 to vector<4x724xf32>
    %10 = arith.mulf %9, %6 : vector<4x724xf32>
    %11 = arith.select %8, %6, %10 : vector<4x724xi1>, vector<4x724xf32>
    %c0_8 = arith.constant 0 : index
    %c0_9 = arith.constant 0 : index
    %12 = vector.load %arg4[%c0_8, %c0_9] : memref<724x84xf32, #tpu.memory_space<vmem>>, vector<724x84xf32>
    %cst_10 = arith.constant dense<0.000000e+00> : vector<4x84xf32>
    %13 = tpu.matmul %11, %12, %cst_10 {dimension_numbers = #tpu.dot_dimension_numbers<[1], [0], [0], [1], [0, 0, 1, 1], [], []>} : vector<4x724xf32>, vector<724x84xf32>, vector<4x84xf32> -> vector<4x84xf32>
    %c0_11 = arith.constant 0 : index
    %c0_12 = arith.constant 0 : index
    %14 = vector.load %arg5[%c0_11, %c0_12] : memref<84x63xf32, #tpu.memory_space<vmem>>, vector<84x63xf32>
    %cst_13 = arith.constant dense<0.000000e+00> : vector<4x63xf32>
    %15 = tpu.matmul %13, %14, %cst_13 {dimension_numbers = #tpu.dot_dimension_numbers<[1], [0], [0], [1], [0, 0, 1, 1], [], []>} : vector<4x84xf32>, vector<84x63xf32>, vector<4x63xf32> -> vector<4x63xf32>
    %c0_14 = arith.constant 0 : index
    %c0_15 = arith.constant 0 : index
    %16 = vector.load %arg6[%c0_14, %c0_15] : memref<1x63xf32, #tpu.memory_space<vmem>>, vector<1x63xf32>
    %17 = vector.broadcast %16 : vector<1x63xf32> to vector<4x63xf32>
    %18 = arith.addf %15, %17 : vector<4x63xf32>
    %cst_16 = arith.constant 0.000000e+00 : f32
    %19 = vector.broadcast %cst_16 : f32 to vector<4x63xf32>
    %20 = arith.cmpf ogt, %18, %19 : vector<4x63xf32>
    %cst_17 = arith.constant 0.00999999977 : f32
    %21 = vector.broadcast %cst_17 : f32 to vector<4x63xf32>
    %22 = arith.mulf %21, %18 : vector<4x63xf32>
    %23 = arith.select %20, %18, %22 : vector<4x63xi1>, vector<4x63xf32>
    %c0_18 = arith.constant 0 : index
    %c0_19 = arith.constant 0 : index
    %24 = vector.load %arg7[%c0_18, %c0_19] : memref<63x30xf32, #tpu.memory_space<vmem>>, vector<63x30xf32>
    %cst_20 = arith.constant dense<0.000000e+00> : vector<4x30xf32>
    %25 = tpu.matmul %23, %24, %cst_20 {dimension_numbers = #tpu.dot_dimension_numbers<[1], [0], [0], [1], [0, 0, 1, 1], [], []>} : vector<4x63xf32>, vector<63x30xf32>, vector<4x30xf32> -> vector<4x30xf32>
    %c0_21 = arith.constant 0 : index
    %c0_22 = arith.constant 0 : index
    %c0_23 = arith.constant 0 : index
    %26 = vector.load %arg8[%c0_21, %c0_22, %c0_23] : memref<1x4x30xf32, #tpu.memory_space<vmem>>, vector<1x4x30xf32>
    %27 = vector.shape_cast %26 : vector<1x4x30xf32> to vector<4x30xf32>
    %28 = vector.shape_cast %25 : vector<4x30xf32> to vector<1x4x30xf32>
    tpu.vector_store %arg8[%c0_21, %c0_22, %c0_23], %28 {strides = array<i32>} : memref<1x4x30xf32, #tpu.memory_space<vmem>>, vector<1x4x30xf32>,
    return
  }
  func.func @transform_0(%arg0: i32) -> (i32, i32, i32) {
    %c0_i32 = arith.constant 0 : i32
    %c0_i32_0 = arith.constant 0 : i32
    %c0_i32_1 = arith.constant 0 : i32
    return %arg0, %c0_i32, %c0_i32_0 : i32, i32, i32
  }
  func.func @transform_1(%arg0: i32) -> (i32, i32) {
    %c0_i32 = arith.constant 0 : i32
    %c0_i32_0 = arith.constant 0 : i32
    %c0_i32_1 = arith.constant 0 : i32
    return %c0_i32, %c0_i32_0 : i32, i32
  }
  func.func @transform_2(%arg0: i32) -> (i32, i32) {
    %c0_i32 = arith.constant 0 : i32
    %c0_i32_0 = arith.constant 0 : i32
    %c0_i32_1 = arith.constant 0 : i32
    return %c0_i32, %c0_i32_0 : i32, i32
  }
  func.func @transform_3(%arg0: i32) -> (i32, i32) {
    %c0_i32 = arith.constant 0 : i32
    %c0_i32_0 = arith.constant 0 : i32
    %c0_i32_1 = arith.constant 0 : i32
    return %c0_i32, %c0_i32_0 : i32, i32
  }
  func.func @transform_4(%arg0: i32) -> (i32, i32) {
    %c0_i32 = arith.constant 0 : i32
    %c0_i32_0 = arith.constant 0 : i32
    %c0_i32_1 = arith.constant 0 : i32
    return %c0_i32, %c0_i32_0 : i32, i32
  }
  func.func @transform_5(%arg0: i32) -> (i32, i32) {
    %c0_i32 = arith.constant 0 : i32
    %c0_i32_0 = arith.constant 0 : i32
    %c0_i32_1 = arith.constant 0 : i32
    return %c0_i32, %c0_i32_0 : i32, i32
  }
  func.func @transform_6(%arg0: i32) -> (i32, i32) {
    %c0_i32 = arith.constant 0 : i32
    %c0_i32_0 = arith.constant 0 : i32
    %c0_i32_1 = arith.constant 0 : i32
    return %c0_i32, %c0_i32_0 : i32, i32
  }
  func.func @transform_7(%arg0: i32) -> (i32, i32, i32) {
    %c0_i32 = arith.constant 0 : i32
    %c0_i32_0 = arith.constant 0 : i32
    %c0_i32_1 = arith.constant 0 : i32
    return %arg0, %c0_i32, %c0_i32_0 : i32, i32, i32
  }
}

</mosaic_0001>

<llo_original>
// kernel: tcnn1d_forward.1
$region0: #{tcnn1d_forward.1}
  #allocation0 [shape = 'u32[]', space=smem, size = 0x4, offset = 0x4, fixed_abs, tag = 'smem constant byte address 0x4 - core index']
  #allocation1 [shape = 'u32[72,128]{1,0:T(1,128)}', space=vmem, size = 0x9000, scoped, tag = 'internal scratch']
  %s0 = inlined_call_operand.vmem [shape: f32[2,4,64], index: 0, kind: input, shape index: {}]
  %s1 = inlined_call_operand.vmem [shape: f32[64,724], index: 1, kind: input, shape index: {}]
  %s2 = inlined_call_operand.vmem [shape: f32[1,724], index: 2, kind: input, shape index: {}]
  %s3 = inlined_call_operand.vmem [shape: f32[724,84], index: 3, kind: input, shape index: {}]
  %s4 = inlined_call_operand.vmem [shape: f32[84,63], index: 4, kind: input, shape index: {}]
  %s5 = inlined_call_operand.vmem [shape: f32[1,63], index: 5, kind: input, shape index: {}]
  %s6 = inlined_call_operand.vmem [shape: f32[63,30], index: 6, kind: input, shape index: {}]
  %s7 = inlined_call_operand.vmem [shape: f32[2,4,30], index: 7, kind: output, shape index: {}]
  %s8 = sld [smem:[#allocation0]]
  $region61: #{tcnn1d_forward.1} parent=0
    _
  %s10 = ssub.s32 1, %s8
  %s11 = scalar_select 0, %s10, %s8
  loop: start=0, step=1, limit=4
  $region2: #{tcnn1d_forward.1} parent=0 // loop_pre_header
    _
  $region3: #{tcnn1d_forward.1} parent=0 // loop_header
    %s13 = sphi 0, %s17
    %p14 = scmp.ge.s32.totalorder %s13, 4
    %s23 = sphi 0, %s25
    %s26 = sphi 0, %s23
    %s27 = sphi 0, %s26
    %s43 = sphi 0, %s27
    %s47 = sphi 0, %s47
    %s49 = sphi 0, %s47
    %s50 = sphi 0, %s49
    %s64 = sphi 0, %s50
    %s68 = sphi 0, %s68
    %s70 = sphi 0, %s68
    %s71 = sphi 0, %s70
    %s85 = sphi 0, %s71
    %s89 = sphi 0, %s89
    %s91 = sphi 0, %s89
    %s92 = sphi 0, %s91
    %s106 = sphi 0, %s92
    %s110 = sphi 0, %s110
    %s112 = sphi 0, %s110
    %s113 = sphi 0, %s112
    %s127 = sphi 0, %s113
    %s131 = sphi 0, %s131
    %s133 = sphi 0, %s131
    %s134 = sphi 0, %s133
    %s148 = sphi 0, %s134
    %s152 = sphi 0, %s152
    %s154 = sphi 0, %s152
    %s155 = sphi 0, %s154
    %s169 = sphi 0, %s155
    %s175 = sphi 0, %s177
    %s178 = sphi 0, %s175
    %s179 = sphi 0, %s178
    %s195 = sphi 0, %s179
  $region4: #{tcnn1d_forward.1} parent=0 // loop_header_branch
    %16 = sbr.rel (%p14) target = $region8
  $region5: #{tcnn1d_forward.1} parent=0 // loop_body
    %s18 = ssub.s32 %s13, 1
    %s19 = ssub.s32 %s13, 2
    %s20 = sadd.s32 %s13, 1
    %s21 = ssub.s32 %s13, %s20
    %p22 = scmp.eq.s32.totalorder %s21, 0
    %s24 = sadd.s32 %s23, 1
    %s25 = scalar_select %p22, %s23, %s24
    %p28 = pneg %p22
    %p29 = scmp.eq.s32.totalorder %s13, 1
    %p30 = por %p28, %p29
    %p31 = scmp.ne.s32.totalorder %s23, %s26
    %p32 = scmp.eq.s32.totalorder %s13, 0
    %p33 = por %p31, %p32
    %p34 = scmp.ne.s32.totalorder %s23, %s26
    %p35 = scmp.eq.s32.totalorder %s18, 1
    %p36 = por %p34, %p35
    %p37 = scmp.ne.s32.totalorder %s26, %s27
    %p38 = scmp.eq.s32.totalorder %s18, 0
    %p39 = por %p37, %p38
    %p40 = scmp.ne.s32.totalorder %s26, %s27
    %p41 = scmp.eq.s32.totalorder %s19, 1
    %p42 = por %p40, %p41
    %p44 = scmp.ne.s32.totalorder %s27, %s43
    %p45 = scmp.eq.s32.totalorder %s19, 0
    %p46 = por %p44, %p45
    %s48 = sadd.s32 %s47, 1
    %p51 = scmp.eq.s32.totalorder %s13, 1
    %p52 = scmp.ne.s32.totalorder %s47, %s49
    %p53 = scmp.eq.s32.totalorder %s13, 0
    %p54 = por %p52, %p53
    %p55 = scmp.ne.s32.totalorder %s47, %s49
    %p56 = scmp.eq.s32.totalorder %s18, 1
    %p57 = por %p55, %p56
    %p58 = scmp.ne.s32.totalorder %s49, %s50
    %p59 = scmp.eq.s32.totalorder %s18, 0
    %p60 = por %p58, %p59
    %p61 = scmp.ne.s32.totalorder %s49, %s50
    %p62 = scmp.eq.s32.totalorder %s19, 1
    %p63 = por %p61, %p62
    %p65 = scmp.ne.s32.totalorder %s50, %s64
    %p66 = scmp.eq.s32.totalorder %s19, 0
    %p67 = por %p65, %p66
    %s69 = sadd.s32 %s68, 1
    %p72 = scmp.eq.s32.totalorder %s13, 1
    %p73 = scmp.ne.s32.totalorder %s68, %s70
    %p74 = scmp.eq.s32.totalorder %s13, 0
    %p75 = por %p73, %p74
    %p76 = scmp.ne.s32.totalorder %s68, %s70
    %p77 = scmp.eq.s32.totalorder %s18, 1
    %p78 = por %p76, %p77
    %p79 = scmp.ne.s32.totalorder %s70, %s71
    %p80 = scmp.eq.s32.totalorder %s18, 0
    %p81 = por %p79, %p80
    %p82 = scmp.ne.s32.totalorder %s70, %s71
    %p83 = scmp.eq.s32.totalorder %s19, 1
    %p84 = por %p82, %p83
    %p86 = scmp.ne.s32.totalorder %s71, %s85
    %p87 = scmp.eq.s32.totalorder %s19, 0
    %p88 = por %p86, %p87
    %s90 = sadd.s32 %s89, 1
    %p93 = scmp.eq.s32.totalorder %s13, 1
    %p94 = scmp.ne.s32.totalorder %s89, %s91
    %p95 = scmp.eq.s32.totalorder %s13, 0
    %p96 = por %p94, %p95
    %p97 = scmp.ne.s32.totalorder %s89, %s91
    %p98 = scmp.eq.s32.totalorder %s18, 1
    %p99 = por %p97, %p98
    %p100 = scmp.ne.s32.totalorder %s91, %s92
    %p101 = scmp.eq.s32.totalorder %s18, 0
    %p102 = por %p100, %p101
    %p103 = scmp.ne.s32.totalorder %s91, %s92
    %p104 = scmp.eq.s32.totalorder %s19, 1
    %p105 = por %p103, %p104
    %p107 = scmp.ne.s32.totalorder %s92, %s106
    %p108 = scmp.eq.s32.totalorder %s19, 0
    %p109 = por %p107, %p108
    %s111 = sadd.s32 %s110, 1
    %p114 = scmp.eq.s32.totalorder %s13, 1
    %p115 = scmp.ne.s32.totalorder %s110, %s112
    %p116 = scmp.eq.s32.totalorder %s13, 0
    %p117 = por %p115, %p116
    %p118 = scmp.ne.s32.totalorder %s110, %s112
    %p119 = scmp.eq.s32.totalorder %s18, 1
    %p120 = por %p118, %p119
    %p121 = scmp.ne.s32.totalorder %s112, %s113
    %p122 = scmp.eq.s32.totalorder %s18, 0
    %p123 = por %p121, %p122
    %p124 = scmp.ne.s32.totalorder %s112, %s113
    %p125 = scmp.eq.s32.totalorder %s19, 1
    %p126 = por %p124, %p125
    %p128 = scmp.ne.s32.totalorder %s113, %s127
    %p129 = scmp.eq.s32.totalorder %s19, 0
    %p130 = por %p128, %p129
    %s132 = sadd.s32 %s131, 1
    %p135 = scmp.eq.s32.totalorder %s13, 1
    %p136 = scmp.ne.s32.totalorder %s131, %s133
    %p137 = scmp.eq.s32.totalorder %s13, 0
    %p138 = por %p136, %p137
    %p139 = scmp.ne.s32.totalorder %s131, %s133
    %p140 = scmp.eq.s32.totalorder %s18, 1
    %p141 = por %p139, %p140
    %p142 = scmp.ne.s32.totalorder %s133, %s134
    %p143 = scmp.eq.s32.totalorder %s18, 0
    %p144 = por %p142, %p143
    %p145 = scmp.ne.s32.totalorder %s133, %s134
    %p146 = scmp.eq.s32.totalorder %s19, 1
    %p147 = por %p145, %p146
    %p149 = scmp.ne.s32.totalorder %s134, %s148
    %p150 = scmp.eq.s32.totalorder %s19, 0
    %p151 = por %p149, %p150
    %s153 = sadd.s32 %s152, 1
    %p156 = scmp.eq.s32.totalorder %s13, 1
    %p157 = scmp.ne.s32.totalorder %s152, %s154
    %p158 = scmp.eq.s32.totalorder %s13, 0
    %p159 = por %p157, %p158
    %p160 = scmp.ne.s32.totalorder %s152, %s154
    %p161 = scmp.eq.s32.totalorder %s18, 1
    %p162 = por %p160, %p161
    %p163 = scmp.ne.s32.totalorder %s154, %s155
    %p164 = scmp.eq.s32.totalorder %s18, 0
    %p165 = por %p163, %p164
    %p166 = scmp.ne.s32.totalorder %s154, %s155
    %p167 = scmp.eq.s32.totalorder %s19, 1
    %p168 = por %p166, %p167
    %p170 = scmp.ne.s32.totalorder %s155, %s169
    %p171 = scmp.eq.s32.totalorder %s19, 0
    %p172 = por %p170, %p171
    %s173 = ssub.s32 %s13, %s20
    %p174 = scmp.eq.s32.totalorder %s173, 0
    %s176 = sadd.s32 %s175, 1
    %s177 = scalar_select %p174, %s175, %s176
    %p180 = pneg %p174
    %p181 = scmp.eq.s32.totalorder %s13, 1
    %p182 = por %p180, %p181
    %p183 = scmp.ne.s32.totalorder %s175, %s178
    %p184 = scmp.eq.s32.totalorder %s13, 0
    %p185 = por %p183, %p184
    %p186 = scmp.ne.s32.totalorder %s175, %s178
    %p187 = scmp.eq.s32.totalorder %s18, 1
    %p188 = por %p186, %p187
    %p189 = scmp.ne.s32.totalorder %s178, %s179
    %p190 = scmp.eq.s32.totalorder %s18, 0
    %p191 = por %p189, %p190
    %p192 = scmp.ne.s32.totalorder %s178, %s179
    %p193 = scmp.eq.s32.totalorder %s19, 1
    %p194 = por %p192, %p193
    %p196 = scmp.ne.s32.totalorder %s179, %s195
    %p197 = scmp.eq.s32.totalorder %s19, 0
    %p198 = por %p196, %p197
    %p199 = scmp.le.s32.totalorder 1, %s13
    %p200 = scmp.lt.s32.totalorder %s13, 3
    %p201 = pnand %p199, %p200
    %p202 = pneg %p201
    // Predicated region
    $region9: #{tcnn1d_forward.1} parent=5 // pred_check
      _
    $region10: #{tcnn1d_forward.1} parent=5 // pred_check_branch
      %204 = sbr.rel (%p201) target = $region12
    $region11: #{tcnn1d_forward.1} parent=5 // pred_region
      %s205 = ssub.s32 %s13, 1
      // Predicated region
      $region13: #{tcnn1d_forward.1} parent=11 // pred_check
        %p206 = pneg %p60
      $region14: #{tcnn1d_forward.1} parent=11 // pred_check_branch
        %208 = sbr.rel (%p206) target = $region16
      $region15: #{tcnn1d_forward.1} parent=11 // pred_region
        _
      $region16: #{tcnn1d_forward.1} parent=11 // pred_fallthru
        _
      // Predicated region
      $region17: #{tcnn1d_forward.1} parent=11 // pred_check
        %p209 = pneg %p81
      $region18: #{tcnn1d_forward.1} parent=11 // pred_check_branch
        %211 = sbr.rel (%p209) target = $region20
      $region19: #{tcnn1d_forward.1} parent=11 // pred_region
        _
      $region20: #{tcnn1d_forward.1} parent=11 // pred_fallthru
        _
      // Predicated region
      $region21: #{tcnn1d_forward.1} parent=11 // pred_check
        %p212 = pneg %p102
      $region22: #{tcnn1d_forward.1} parent=11 // pred_check_branch
        %214 = sbr.rel (%p212) target = $region24
      $region23: #{tcnn1d_forward.1} parent=11 // pred_region
        _
      $region24: #{tcnn1d_forward.1} parent=11 // pred_fallthru
        _
      // Predicated region
      $region25: #{tcnn1d_forward.1} parent=11 // pred_check
        %p215 = pneg %p123
      $region26: #{tcnn1d_forward.1} parent=11 // pred_check_branch
        %217 = sbr.rel (%p215) target = $region28
      $region27: #{tcnn1d_forward.1} parent=11 // pred_region
        _
      $region28: #{tcnn1d_forward.1} parent=11 // pred_fallthru
        _
      // Predicated region
      $region29: #{tcnn1d_forward.1} parent=11 // pred_check
        %p218 = pneg %p144
      $region30: #{tcnn1d_forward.1} parent=11 // pred_check_branch
        %220 = sbr.rel (%p218) target = $region32
      $region31: #{tcnn1d_forward.1} parent=11 // pred_region
        _
      $region32: #{tcnn1d_forward.1} parent=11 // pred_fallthru
        _
      // Predicated region
      $region33: #{tcnn1d_forward.1} parent=11 // pred_check
        %p221 = pneg %p165
      $region34: #{tcnn1d_forward.1} parent=11 // pred_check_branch
        %223 = sbr.rel (%p221) target = $region36
      $region35: #{tcnn1d_forward.1} parent=11 // pred_region
        _
      $region36: #{tcnn1d_forward.1} parent=11 // pred_fallthru
        _
    $region12: #{tcnn1d_forward.1} parent=5 // pred_fallthru
      _
    %p224 = scmp.lt.s32.totalorder %s13, 2
    // Predicated region
    $region37: #{tcnn1d_forward.1} parent=5 // pred_check
      %p225 = pneg %p224
    $region38: #{tcnn1d_forward.1} parent=5 // pred_check_branch
      %227 = sbr.rel (%p225) target = $region40
    $region39: #{tcnn1d_forward.1} parent=5 // pred_region
      // Predicated region
      $region41: #{tcnn1d_forward.1} parent=39 // pred_check
        %p228 = pneg %p33
      $region42: #{tcnn1d_forward.1} parent=39 // pred_check_branch
        %230 = sbr.rel (%p228) target = $region44
      $region43: #{tcnn1d_forward.1} parent=39 // pred_region
        %p231 = scmp.lt.s32.totalorder %s13, 1
        %s232 = scalar_select %p231, %s13, 1
        %s233 = smul.addr %s232, 4
        %s234 = scalar_lea.vmem %s0, %s233
      $region44: #{tcnn1d_forward.1} parent=39 // pred_fallthru
        _
    $region40: #{tcnn1d_forward.1} parent=5 // pred_fallthru
      _
    %p235 = scmp.le.s32.totalorder 1, %s13
    %p236 = scmp.lt.s32.totalorder %s13, 3
    %p237 = pnand %p235, %p236
    %p238 = pneg %p237
    // Predicated region
    $region45: #{tcnn1d_forward.1} parent=5 // pred_check
      _
    $region46: #{tcnn1d_forward.1} parent=5 // pred_check_branch
      %240 = sbr.rel (%p237) target = $region48
    $region47: #{tcnn1d_forward.1} parent=5 // pred_region
      %s241 = ssub.s32 %s13, 1
      %p242 = scmp.lt.s32.totalorder %s18, 1
      %s243 = scalar_select %p242, %s18, 1
      %s244 = smul.addr %s243, 4
      %s245 = scalar_lea.vmem %s0, %s244
      %p246 = pneg %p39
      %p247 = pneg %p36
      %p248 = pneg %p60
      %p249 = pneg %p57
      %p250 = pneg %p81
      %p251 = pneg %p78
      %p252 = pneg %p102
      %p253 = pneg %p99
      %p254 = pneg %p123
      %p255 = pneg %p120
      %p256 = pneg %p144
      %p257 = pneg %p141
      %p258 = pneg %p165
      %p259 = pneg %p162
      %p260 = pneg %p191
      %p261 = pneg %p188
      %p262 = scmp.lt.s32.totalorder %s18, 1
      %s263 = scalar_select %p262, %s18, 1
      %s264 = smul.addr %s263, 4
      %s265 = scalar_lea.vmem %s7, %s264
      %p266 = scmp.lt.s32.totalorder %s18, 1
      %s267 = scalar_select %p266, %s18, 1
      %s268 = smul.addr %s267, 4
      %s269 = scalar_lea.vmem %s0, %s268
      %p270 = scmp.lt.s32.totalorder %s18, 1
      %s271 = scalar_select %p270, %s18, 1
      %s272 = smul.addr %s271, 4
      %s273 = scalar_lea.vmem %s7, %s272
      %v274 = vld [vmem:[%s269] sm:$0xf]
      %v275 = vld [vmem:[%s1] sm:$0xff]
      %v276 = vld [vmem:[%s1 + $0x8] sm:$0xff]
      %v277 = vld [vmem:[%s1 + $0x10] sm:$0xff]
      %v278 = vld [vmem:[%s1 + $0x18] sm:$0xff]
      %v279 = vld [vmem:[%s1 + $0x20] sm:$0xff]
      %v280 = vld [vmem:[%s1 + $0x28] sm:$0xff]
      %v281 = vld [vmem:[%s1 + $0x30] sm:$0xff]
      %v282 = vld [vmem:[%s1 + $0x38] sm:$0xff]
      %v283 = vld [vmem:[%s1 + $0x40] sm:$0xff]
      %v284 = vld [vmem:[%s1 + $0x48] sm:$0xff]
      %v285 = vld [vmem:[%s1 + $0x50] sm:$0xff]
      %v286 = vld [vmem:[%s1 + $0x58] sm:$0xff]
      %v287 = vld [vmem:[%s1 + $0x60] sm:$0xff]
      %v288 = vld [vmem:[%s1 + $0x68] sm:$0xff]
      %v289 = vld [vmem:[%s1 + $0x70] sm:$0xff]
      %v290 = vld [vmem:[%s1 + $0x78] sm:$0xff]
      %v291 = vld [vmem:[%s1 + $0x80] sm:$0xff]
      %v292 = vld [vmem:[%s1 + $0x88] sm:$0xff]
      %v293 = vld [vmem:[%s1 + $0x90] sm:$0xff]
      %v294 = vld [vmem:[%s1 + $0x98] sm:$0xff]
      %v295 = vld [vmem:[%s1 + $0xa0] sm:$0xff]
      %v296 = vld [vmem:[%s1 + $0xa8] sm:$0xff]
      %v297 = vld [vmem:[%s1 + $0xb0] sm:$0xff]
      %v298 = vld [vmem:[%s1 + $0xb8] sm:$0xff]
      %v299 = vld [vmem:[%s1 + $0xc0] sm:$0xff]
      %v300 = vld [vmem:[%s1 + $0xc8] sm:$0xff]
      %v301 = vld [vmem:[%s1 + $0xd0] sm:$0xff]
      %v302 = vld [vmem:[%s1 + $0xd8] sm:$0xff]
      %v303 = vld [vmem:[%s1 + $0xe0] sm:$0xff]
      %v304 = vld [vmem:[%s1 + $0xe8] sm:$0xff]
      %v305 = vld [vmem:[%s1 + $0xf0] sm:$0xff]
      %v306 = vld [vmem:[%s1 + $0xf8] sm:$0xff]
      %v307 = vld [vmem:[%s1 + $0x100] sm:$0xff]
      %v308 = vld [vmem:[%s1 + $0x108] sm:$0xff]
      %v309 = vld [vmem:[%s1 + $0x110] sm:$0xff]
      %v310 = vld [vmem:[%s1 + $0x118] sm:$0xff]
      %v311 = vld [vmem:[%s1 + $0x120] sm:$0xff]
      %v312 = vld [vmem:[%s1 + $0x128] sm:$0xff]
      %v313 = vld [vmem:[%s1 + $0x130] sm:$0xff]
      %v314 = vld [vmem:[%s1 + $0x138] sm:$0xff]
      %v315 = vld [vmem:[%s1 + $0x140] sm:$0xff]
      %v316 = vld [vmem:[%s1 + $0x148] sm:$0xff]
      %v317 = vld [vmem:[%s1 + $0x150] sm:$0xff]
      %v318 = vld [vmem:[%s1 + $0x158] sm:$0xff]
      %v319 = vld [vmem:[%s1 + $0x160] sm:$0xff]
      %v320 = vld [vmem:[%s1 + $0x168] sm:$0xff]
      %v321 = vld [vmem:[%s1 + $0x170] sm:$0xff]
      %v322 = vld [vmem:[%s1 + $0x178] sm:$0xff]
      %v323 = vld [vmem:[%s2] sm:$0x3f]
      %v325 = vperm.slane %v323, 0
      %v326 = vperm.slane %v323, 1
      %v327 = vperm.slane %v323, 2
      %v328 = vperm.slane %v323, 3
      %v329 = vperm.slane %v323, 4
      %v330 = vperm.slane %v323, 5
      %vm337 = vcmask 523264
      %v339 = vsel %vm337, %v274, 0
      %341 = vmatpush.msra.mxu0 0.0
      %342 = vmatpush.msra.mxu0 0.0
      %343 = vmatpush.msra.mxu0 0.0
      %344 = vmatpush.msra.mxu0 0.0
      %345 = vmatpush.msra.mxu0 0.0
      %346 = vmatpush.msra.mxu0 0.0
      %347 = vmatpush.msra.mxu0 0.0
      %348 = vmatpush.msra.mxu0 0.0
      %349 = vmatpush.msra.mxu0 %v317
      %350 = vmatpush.msra.mxu0 %v311
      %351 = vmatpush.msra.mxu0 %v305
      %352 = vmatpush.msra.mxu0 %v299
      %353 = vmatpush.msra.mxu0 %v293
      %354 = vmatpush.msra.mxu0 %v287
      %355 = vmatpush.msra.mxu0 %v281
      %356 = vmatpush.msra.mxu0 %v275
      %357 = vmatmul.f32.gmra.mxu0 %v339
      %v358 = vpop.f32.mrf.mxu0
      %v359 = vadd.f32 %v325, %v358
      %360 = vdwg.mxu0
      %361 = vmatpush.msra.mxu0 0.0
      %362 = vmatpush.msra.mxu0 0.0
      %363 = vmatpush.msra.mxu0 0.0
      %364 = vmatpush.msra.mxu0 0.0
      %365 = vmatpush.msra.mxu0 0.0
      %366 = vmatpush.msra.mxu0 0.0
      %367 = vmatpush.msra.mxu0 0.0
      %368 = vmatpush.msra.mxu0 0.0
      %369 = vmatpush.msra.mxu0 %v318
      %370 = vmatpush.msra.mxu0 %v312
      %371 = vmatpush.msra.mxu0 %v306
      %372 = vmatpush.msra.mxu0 %v300
      %373 = vmatpush.msra.mxu0 %v294
      %374 = vmatpush.msra.mxu0 %v288
      %375 = vmatpush.msra.mxu0 %v282
      %376 = vmatpush.msra.mxu0 %v276
      %377 = vmatmul.f32.gmra.mxu0 %v339
      %v378 = vpop.f32.mrf.mxu0
      %v379 = vadd.f32 %v326, %v378
      %380 = vdwg.mxu0
      %381 = vmatpush.msra.mxu0 0.0
      %382 = vmatpush.msra.mxu0 0.0
      %383 = vmatpush.msra.mxu0 0.0
      %384 = vmatpush.msra.mxu0 0.0
      %385 = vmatpush.msra.mxu0 0.0
      %386 = vmatpush.msra.mxu0 0.0
      %387 = vmatpush.msra.mxu0 0.0
      %388 = vmatpush.msra.mxu0 0.0
      %389 = vmatpush.msra.mxu0 %v319
      %390 = vmatpush.msra.mxu0 %v313
      %391 = vmatpush.msra.mxu0 %v307
      %392 = vmatpush.msra.mxu0 %v301
      %393 = vmatpush.msra.mxu0 %v295
      %394 = vmatpush.msra.mxu0 %v289
      %395 = vmatpush.msra.mxu0 %v283
      %396 = vmatpush.msra.mxu0 %v277
      %397 = vmatmul.f32.gmra.mxu0 %v339
      %v398 = vpop.f32.mrf.mxu0
      %v399 = vadd.f32 %v327, %v398
      %400 = vdwg.mxu0
      %401 = vmatpush.msra.mxu0 0.0
      %402 = vmatpush.msra.mxu0 0.0
      %403 = vmatpush.msra.mxu0 0.0
      %404 = vmatpush.msra.mxu0 0.0
      %405 = vmatpush.msra.mxu0 0.0
      %406 = vmatpush.msra.mxu0 0.0
      %407 = vmatpush.msra.mxu0 0.0
      %408 = vmatpush.msra.mxu0 0.0
      %409 = vmatpush.msra.mxu0 %v320
      %410 = vmatpush.msra.mxu0 %v314
      %411 = vmatpush.msra.mxu0 %v308
      %412 = vmatpush.msra.mxu0 %v302
      %413 = vmatpush.msra.mxu0 %v296
      %414 = vmatpush.msra.mxu0 %v290
      %415 = vmatpush.msra.mxu0 %v284
      %416 = vmatpush.msra.mxu0 %v278
      %417 = vmatmul.f32.gmra.mxu0 %v339
      %v418 = vpop.f32.mrf.mxu0
      %v419 = vadd.f32 %v328, %v418
      %420 = vdwg.mxu0
      %421 = vmatpush.msra.mxu0 0.0
      %422 = vmatpush.msra.mxu0 0.0
      %423 = vmatpush.msra.mxu0 0.0
      %424 = vmatpush.msra.mxu0 0.0
      %425 = vmatpush.msra.mxu0 0.0
      %426 = vmatpush.msra.mxu0 0.0
      %427 = vmatpush.msra.mxu0 0.0
      %428 = vmatpush.msra.mxu0 0.0
      %429 = vmatpush.msra.mxu0 %v321
      %430 = vmatpush.msra.mxu0 %v315
      %431 = vmatpush.msra.mxu0 %v309
      %432 = vmatpush.msra.mxu0 %v303
      %433 = vmatpush.msra.mxu0 %v297
      %434 = vmatpush.msra.mxu0 %v291
      %435 = vmatpush.msra.mxu0 %v285
      %436 = vmatpush.msra.mxu0 %v279
      %437 = vmatmul.f32.gmra.mxu0 %v339
      %v438 = vpop.f32.mrf.mxu0
      %v439 = vadd.f32 %v329, %v438
      %440 = vdwg.mxu0
      %441 = vmatpush.msra.mxu0 0.0
      %442 = vmatpush.msra.mxu0 0.0
      %443 = vmatpush.msra.mxu0 0.0
      %444 = vmatpush.msra.mxu0 0.0
      %445 = vmatpush.msra.mxu0 0.0
      %446 = vmatpush.msra.mxu0 0.0
      %447 = vmatpush.msra.mxu0 0.0
      %448 = vmatpush.msra.mxu0 0.0
      %449 = vmatpush.msra.mxu0 %v322
      %450 = vmatpush.msra.mxu0 %v316
      %451 = vmatpush.msra.mxu0 %v310
      %452 = vmatpush.msra.mxu0 %v304
      %453 = vmatpush.msra.mxu0 %v298
      %454 = vmatpush.msra.mxu0 %v292
      %455 = vmatpush.msra.mxu0 %v286
      %456 = vmatpush.msra.mxu0 %v280
      %457 = vmatmul.f32.gmra.mxu0 %v339
      %v458 = vpop.f32.mrf.mxu0
      %v459 = vadd.f32 %v330, %v458
      %460 = vdwg.mxu0
      %vm461 = vcmp.gt.f32.partialorder %v359, 0.0
      %vm462 = vcmp.gt.f32.partialorder %v379, 0.0
      %vm463 = vcmp.gt.f32.partialorder %v399, 0.0
      %vm464 = vcmp.gt.f32.partialorder %v419, 0.0
      %vm465 = vcmp.gt.f32.partialorder %v439, 0.0
      %vm466 = vcmp.gt.f32.partialorder %v459, 0.0
      %v467 = vmul.f32 %v359, 0.01
      %v468 = vmul.f32 %v379, 0.01
      %v469 = vmul.f32 %v399, 0.01
      %v470 = vmul.f32 %v419, 0.01
      %v471 = vmul.f32 %v439, 0.01
      %v472 = vmul.f32 %v459, 0.01
      %v473 = vsel %vm461, %v359, %v467
      %v474 = vsel %vm462, %v379, %v468
      %v475 = vsel %vm463, %v399, %v469
      %v476 = vsel %vm464, %v419, %v470
      %v477 = vsel %vm465, %v439, %v471
      %v478 = vsel %vm466, %v459, %v472
      %v479 = vld [vmem:[%s3] sm:$0xff]
      %v480 = vld [vmem:[%s3 + $0x8] sm:$0xff]
      %v481 = vld [vmem:[%s3 + $0x10] sm:$0xff]
      %v482 = vld [vmem:[%s3 + $0x18] sm:$0xff]
      %v483 = vld [vmem:[%s3 + $0x20] sm:$0xff]
      %v484 = vld [vmem:[%s3 + $0x28] sm:$0xff]
      %v485 = vld [vmem:[%s3 + $0x30] sm:$0xff]
      %v486 = vld [vmem:[%s3 + $0x38] sm:$0xff]
      %v487 = vld [vmem:[%s3 + $0x40] sm:$0xff]
      %v488 = vld [vmem:[%s3 + $0x48] sm:$0xff]
      %v489 = vld [vmem:[%s3 + $0x50] sm:$0xff]
      %v490 = vld [vmem:[%s3 + $0x58] sm:$0xff]
      %v491 = vld [vmem:[%s3 + $0x60] sm:$0xff]
      %v492 = vld [vmem:[%s3 + $0x68] sm:$0xff]
      %v493 = vld [vmem:[%s3 + $0x70] sm:$0xff]
      %v494 = vld [vmem:[%s3 + $0x78] sm:$0xff]
      %v495 = vld [vmem:[%s3 + $0x80] sm:$0xff]
      %v496 = vld [vmem:[%s3 + $0x88] sm:$0xff]
      %v497 = vld [vmem:[%s3 + $0x90] sm:$0xff]
      %v498 = vld [vmem:[%s3 + $0x98] sm:$0xff]
      %v499 = vld [vmem:[%s3 + $0xa0] sm:$0xff]
      %v500 = vld [vmem:[%s3 + $0xa8] sm:$0xff]
      %v501 = vld [vmem:[%s3 + $0xb0] sm:$0xff]
      %v502 = vld [vmem:[%s3 + $0xb8] sm:$0xff]
      %v503 = vld [vmem:[%s3 + $0xc0] sm:$0xff]
      %v504 = vld [vmem:[%s3 + $0xc8] sm:$0xff]
      %v505 = vld [vmem:[%s3 + $0xd0] sm:$0xff]
      %v506 = vld [vmem:[%s3 + $0xd8] sm:$0xff]
      %v507 = vld [vmem:[%s3 + $0xe0] sm:$0xff]
      %v508 = vld [vmem:[%s3 + $0xe8] sm:$0xff]
      %v509 = vld [vmem:[%s3 + $0xf0] sm:$0xff]
      %v510 = vld [vmem:[%s3 + $0xf8] sm:$0xff]
      %v511 = vld [vmem:[%s3 + $0x100] sm:$0xff]
      %v512 = vld [vmem:[%s3 + $0x108] sm:$0xff]
      %v513 = vld [vmem:[%s3 + $0x110] sm:$0xff]
      %v514 = vld [vmem:[%s3 + $0x118] sm:$0xff]
      %v515 = vld [vmem:[%s3 + $0x120] sm:$0xff]
      %v516 = vld [vmem:[%s3 + $0x128] sm:$0xff]
      %v517 = vld [vmem:[%s3 + $0x130] sm:$0xff]
      %v518 = vld [vmem:[%s3 + $0x138] sm:$0xff]
      %v519 = vld [vmem:[%s3 + $0x140] sm:$0xff]
      %v520 = vld [vmem:[%s3 + $0x148] sm:$0xff]
      %v521 = vld [vmem:[%s3 + $0x150] sm:$0xff]
      %v522 = vld [vmem:[%s3 + $0x158] sm:$0xff]
      %v523 = vld [vmem:[%s3 + $0x160] sm:$0xff]
      %v524 = vld [vmem:[%s3 + $0x168] sm:$0xff]
      %v525 = vld [vmem:[%s3 + $0x170] sm:$0xff]
      %v526 = vld [vmem:[%s3 + $0x178] sm:$0xff]
      %v527 = vld [vmem:[%s3 + $0x180] sm:$0xff]
      %v528 = vld [vmem:[%s3 + $0x188] sm:$0xff]
      %v529 = vld [vmem:[%s3 + $0x190] sm:$0xff]
      %v530 = vld [vmem:[%s3 + $0x198] sm:$0xff]
      %v531 = vld [vmem:[%s3 + $0x1a0] sm:$0xff]
      %v532 = vld [vmem:[%s3 + $0x1a8] sm:$0xff]
      %v533 = vld [vmem:[%s3 + $0x1b0] sm:$0xff]
      %v534 = vld [vmem:[%s3 + $0x1b8] sm:$0xff]
      %v535 = vld [vmem:[%s3 + $0x1c0] sm:$0xff]
      %v536 = vld [vmem:[%s3 + $0x1c8] sm:$0xff]
      %v537 = vld [vmem:[%s3 + $0x1d0] sm:$0xff]
      %v538 = vld [vmem:[%s3 + $0x1d8] sm:$0xff]
      %v539 = vld [vmem:[%s3 + $0x1e0] sm:$0xff]
      %v540 = vld [vmem:[%s3 + $0x1e8] sm:$0xff]
      %v541 = vld [vmem:[%s3 + $0x1f0] sm:$0xff]
      %v542 = vld [vmem:[%s3 + $0x1f8] sm:$0xff]
      %v543 = vld [vmem:[%s3 + $0x200] sm:$0xff]
      %v544 = vld [vmem:[%s3 + $0x208] sm:$0xff]
      %v545 = vld [vmem:[%s3 + $0x210] sm:$0xff]
      %v546 = vld [vmem:[%s3 + $0x218] sm:$0xff]
      %v547 = vld [vmem:[%s3 + $0x220] sm:$0xff]
      %v548 = vld [vmem:[%s3 + $0x228] sm:$0xff]
      %v549 = vld [vmem:[%s3 + $0x230] sm:$0xff]
      %v550 = vld [vmem:[%s3 + $0x238] sm:$0xff]
      %v551 = vld [vmem:[%s3 + $0x240] sm:$0xff]
      %v552 = vld [vmem:[%s3 + $0x248] sm:$0xff]
      %v553 = vld [vmem:[%s3 + $0x250] sm:$0xff]
      %v554 = vld [vmem:[%s3 + $0x258] sm:$0xff]
      %v555 = vld [vmem:[%s3 + $0x260] sm:$0xff]
      %v556 = vld [vmem:[%s3 + $0x268] sm:$0xff]
      %v557 = vld [vmem:[%s3 + $0x270] sm:$0xff]
      %v558 = vld [vmem:[%s3 + $0x278] sm:$0xff]
      %v559 = vld [vmem:[%s3 + $0x280] sm:$0xff]
      %v560 = vld [vmem:[%s3 + $0x288] sm:$0xff]
      %v561 = vld [vmem:[%s3 + $0x290] sm:$0xff]
      %v562 = vld [vmem:[%s3 + $0x298] sm:$0xff]
      %v563 = vld [vmem:[%s3 + $0x2a0] sm:$0xff]
      %v564 = vld [vmem:[%s3 + $0x2a8] sm:$0xff]
      %v565 = vld [vmem:[%s3 + $0x2b0] sm:$0xff]
      %v566 = vld [vmem:[%s3 + $0x2b8] sm:$0xff]
      %v567 = vld [vmem:[%s3 + $0x2c0] sm:$0xff]
      %v568 = vld [vmem:[%s3 + $0x2c8] sm:$0xff]
      %v569 = vld [vmem:[%s3 + $0x2d0] sm:$0xf]
      %vm570 = vcmask 687104
      %v572 = vsel %vm570, %v478, 0
      %vm574 = vcmask 1043456
      %v576 = vsel %vm574, %v569, 0
      %578 = vmatpush.msra.mxu0 %v494
      %579 = vmatpush.msra.mxu0 %v493
      %580 = vmatpush.msra.mxu0 %v492
      %581 = vmatpush.msra.mxu0 %v491
      %582 = vmatpush.msra.mxu0 %v490
      %583 = vmatpush.msra.mxu0 %v489
      %584 = vmatpush.msra.mxu0 %v488
      %585 = vmatpush.msra.mxu0 %v487
      %586 = vmatpush.msra.mxu0 %v486
      %587 = vmatpush.msra.mxu0 %v485
      %588 = vmatpush.msra.mxu0 %v484
      %589 = vmatpush.msra.mxu0 %v483
      %590 = vmatpush.msra.mxu0 %v482
      %591 = vmatpush.msra.mxu0 %v481
      %592 = vmatpush.msra.mxu0 %v480
      %593 = vmatpush.msra.mxu0 %v479
      %594 = vmatmul.f32.gmra.mxu0 %v473
      %v595 = vpop.f32.mrf.mxu0
      %v596 = vadd.f32 0.0, %v595
      %597 = vdwg.mxu0
      %598 = vmatpush.msra.mxu0 %v510
      %599 = vmatpush.msra.mxu0 %v509
      %600 = vmatpush.msra.mxu0 %v508
      %601 = vmatpush.msra.mxu0 %v507
      %602 = vmatpush.msra.mxu0 %v506
      %603 = vmatpush.msra.mxu0 %v505
      %604 = vmatpush.msra.mxu0 %v504
      %605 = vmatpush.msra.mxu0 %v503
      %606 = vmatpush.msra.mxu0 %v502
      %607 = vmatpush.msra.mxu0 %v501
      %608 = vmatpush.msra.mxu0 %v500
      %609 = vmatpush.msra.mxu0 %v499
      %610 = vmatpush.msra.mxu0 %v498
      %611 = vmatpush.msra.mxu0 %v497
      %612 = vmatpush.msra.mxu0 %v496
      %613 = vmatpush.msra.mxu0 %v495
      %614 = vmatmul.f32.gmra.mxu0 %v474
      %v615 = vpop.f32.mrf.mxu0
      %v616 = vadd.f32 %v596, %v615
      %617 = vdwg.mxu0
      %618 = vmatpush.msra.mxu0 %v526
      %619 = vmatpush.msra.mxu0 %v525
      %620 = vmatpush.msra.mxu0 %v524
      %621 = vmatpush.msra.mxu0 %v523
      %622 = vmatpush.msra.mxu0 %v522
      %623 = vmatpush.msra.mxu0 %v521
      %624 = vmatpush.msra.mxu0 %v520
      %625 = vmatpush.msra.mxu0 %v519
      %626 = vmatpush.msra.mxu0 %v518
      %627 = vmatpush.msra.mxu0 %v517
      %628 = vmatpush.msra.mxu0 %v516
      %629 = vmatpush.msra.mxu0 %v515
      %630 = vmatpush.msra.mxu0 %v514
      %631 = vmatpush.msra.mxu0 %v513
      %632 = vmatpush.msra.mxu0 %v512
      %633 = vmatpush.msra.mxu0 %v511
      %634 = vmatmul.f32.gmra.mxu0 %v475
      %v635 = vpop.f32.mrf.mxu0
      %v636 = vadd.f32 %v616, %v635
      %637 = vdwg.mxu0
      %638 = vmatpush.msra.mxu0 %v542
      %639 = vmatpush.msra.mxu0 %v541
      %640 = vmatpush.msra.mxu0 %v540
      %641 = vmatpush.msra.mxu0 %v539
      %642 = vmatpush.msra.mxu0 %v538
      %643 = vmatpush.msra.mxu0 %v537
      %644 = vmatpush.msra.mxu0 %v536
      %645 = vmatpush.msra.mxu0 %v535
      %646 = vmatpush.msra.mxu0 %v534
      %647 = vmatpush.msra.mxu0 %v533
      %648 = vmatpush.msra.mxu0 %v532
      %649 = vmatpush.msra.mxu0 %v531
      %650 = vmatpush.msra.mxu0 %v530
      %651 = vmatpush.msra.mxu0 %v529
      %652 = vmatpush.msra.mxu0 %v528
      %653 = vmatpush.msra.mxu0 %v527
      %654 = vmatmul.f32.gmra.mxu0 %v476
      %v655 = vpop.f32.mrf.mxu0
      %v656 = vadd.f32 %v636, %v655
      %657 = vdwg.mxu0
      %658 = vmatpush.msra.mxu0 %v558
      %659 = vmatpush.msra.mxu0 %v557
      %660 = vmatpush.msra.mxu0 %v556
      %661 = vmatpush.msra.mxu0 %v555
      %662 = vmatpush.msra.mxu0 %v554
      %663 = vmatpush.msra.mxu0 %v553
      %664 = vmatpush.msra.mxu0 %v552
      %665 = vmatpush.msra.mxu0 %v551
      %666 = vmatpush.msra.mxu0 %v550
      %667 = vmatpush.msra.mxu0 %v549
      %668 = vmatpush.msra.mxu0 %v548
      %669 = vmatpush.msra.mxu0 %v547
      %670 = vmatpush.msra.mxu0 %v546
      %671 = vmatpush.msra.mxu0 %v545
      %672 = vmatpush.msra.mxu0 %v544
      %673 = vmatpush.msra.mxu0 %v543
      %674 = vmatmul.f32.gmra.mxu0 %v477
      %v675 = vpop.f32.mrf.mxu0
      %v676 = vadd.f32 %v656, %v675
      %677 = vdwg.mxu0
      %678 = vmatpush.msra.mxu0 0.0
      %679 = vmatpush.msra.mxu0 0.0
      %680 = vmatpush.msra.mxu0 0.0
      %681 = vmatpush.msra.mxu0 0.0
      %682 = vmatpush.msra.mxu0 0.0
      %683 = vmatpush.msra.mxu0 %v576
      %684 = vmatpush.msra.mxu0 %v568
      %685 = vmatpush.msra.mxu0 %v567
      %686 = vmatpush.msra.mxu0 %v566
      %687 = vmatpush.msra.mxu0 %v565
      %688 = vmatpush.msra.mxu0 %v564
      %689 = vmatpush.msra.mxu0 %v563
      %690 = vmatpush.msra.mxu0 %v562
      %691 = vmatpush.msra.mxu0 %v561
      %692 = vmatpush.msra.mxu0 %v560
      %693 = vmatpush.msra.mxu0 %v559
      %694 = vmatmul.f32.gmra.mxu0 %v572
      %v695 = vpop.f32.mrf.mxu0
      %v696 = vadd.f32 %v676, %v695
      %697 = vdwg.mxu0
      %v698 = vld [vmem:[%s4] sm:$0xff]
      %v699 = vld [vmem:[%s4 + $0x8] sm:$0xff]
      %v700 = vld [vmem:[%s4 + $0x10] sm:$0xff]
      %v701 = vld [vmem:[%s4 + $0x18] sm:$0xff]
      %v702 = vld [vmem:[%s4 + $0x20] sm:$0xff]
      %v703 = vld [vmem:[%s4 + $0x28] sm:$0xff]
      %v704 = vld [vmem:[%s4 + $0x30] sm:$0xff]
      %v705 = vld [vmem:[%s4 + $0x38] sm:$0xff]
      %v706 = vld [vmem:[%s4 + $0x40] sm:$0xff]
      %v707 = vld [vmem:[%s4 + $0x48] sm:$0xff]
      %v708 = vld [vmem:[%s4 + $0x50] sm:$0xf]
      %v709 = vld [vmem:[%s5] sm:$0x1]
      %v711 = vperm.slane %v709, 0
      %v714 = vsel %vm570, %v696, 0
      %v717 = vsel %vm574, %v708, 0
      %719 = vmatpush.msra.mxu0 0.0
      %720 = vmatpush.msra.mxu0 0.0
      %721 = vmatpush.msra.mxu0 0.0
      %722 = vmatpush.msra.mxu0 0.0
      %723 = vmatpush.msra.mxu0 0.0
      %724 = vmatpush.msra.mxu0 %v717
      %725 = vmatpush.msra.mxu0 %v707
      %726 = vmatpush.msra.mxu0 %v706
      %727 = vmatpush.msra.mxu0 %v705
      %728 = vmatpush.msra.mxu0 %v704
      %729 = vmatpush.msra.mxu0 %v703
      %730 = vmatpush.msra.mxu0 %v702
      %731 = vmatpush.msra.mxu0 %v701
      %732 = vmatpush.msra.mxu0 %v700
      %733 = vmatpush.msra.mxu0 %v699
      %734 = vmatpush.msra.mxu0 %v698
      %735 = vmatmul.f32.gmra.mxu0 %v714
      %v736 = vpop.f32.mrf.mxu0
      %v737 = vadd.f32 %v711, %v736
      %738 = vdwg.mxu0
      %vm739 = vcmp.gt.f32.partialorder %v737, 0.0
      %v740 = vmul.f32 %v737, 0.01
      %v741 = vsel %vm739, %v737, %v740
      %v742 = vld [vmem:[%s6] sm:$0xff]
      %v743 = vld [vmem:[%s6 + $0x8] sm:$0xff]
      %v744 = vld [vmem:[%s6 + $0x10] sm:$0xff]
      %v745 = vld [vmem:[%s6 + $0x18] sm:$0xff]
      %v746 = vld [vmem:[%s6 + $0x20] sm:$0xff]
      %v747 = vld [vmem:[%s6 + $0x28] sm:$0xff]
      %v748 = vld [vmem:[%s6 + $0x30] sm:$0xff]
      %v749 = vld [vmem:[%s6 + $0x38] sm:$0x7f]
      %vm750 = vcmask 515072
      %v752 = vsel %vm750, %v741, 0
      %vm754 = vcmask 1046528
      %v756 = vsel %vm754, %v749, 0
      %758 = vmatpush.msra.mxu0 0.0
      %759 = vmatpush.msra.mxu0 0.0
      %760 = vmatpush.msra.mxu0 0.0
      %761 = vmatpush.msra.mxu0 0.0
      %762 = vmatpush.msra.mxu0 0.0
      %763 = vmatpush.msra.mxu0 0.0
      %764 = vmatpush.msra.mxu0 0.0
      %765 = vmatpush.msra.mxu0 0.0
      %766 = vmatpush.msra.mxu0 %v756
      %767 = vmatpush.msra.mxu0 %v748
      %768 = vmatpush.msra.mxu0 %v747
      %769 = vmatpush.msra.mxu0 %v746
      %770 = vmatpush.msra.mxu0 %v745
      %771 = vmatpush.msra.mxu0 %v744
      %772 = vmatpush.msra.mxu0 %v743
      %773 = vmatpush.msra.mxu0 %v742
      %774 = vmatmul.f32.gmra.mxu0 %v752
      %v775 = vpop.f32.mrf.mxu0
      %v776 = vadd.f32 0.0, %v775
      %777 = vdwg.mxu0
      %vm778 = vcmask 240640
      %779 = vst.msk [vmem:[%s273] sm:$0xf] %vm778, %v776
      %p780 = scmp.lt.s32.totalorder %s18, 1
      %s781 = scalar_select %p780, %s18, 1
      %s782 = smul.addr %s781, 4
      %s783 = scalar_lea.vmem %s7, %s782
      // Predicated region
      $region49: #{tcnn1d_forward.1} parent=47 // pred_check
        %p784 = pneg %p188
      $region50: #{tcnn1d_forward.1} parent=47 // pred_check_branch
        %786 = sbr.rel (%p784) target = $region52
      $region51: #{tcnn1d_forward.1} parent=47 // pred_region
        _
      $region52: #{tcnn1d_forward.1} parent=47 // pred_fallthru
        _
    $region48: #{tcnn1d_forward.1} parent=5 // pred_fallthru
      _
    %p787 = scmp.le.s32.totalorder 2, %s13
    // Predicated region
    $region53: #{tcnn1d_forward.1} parent=5 // pred_check
      %p788 = pneg %p787
    $region54: #{tcnn1d_forward.1} parent=5 // pred_check_branch
      %790 = sbr.rel (%p788) target = $region56
    $region55: #{tcnn1d_forward.1} parent=5 // pred_region
      %s791 = ssub.s32 %s13, 2
      // Predicated region
      $region57: #{tcnn1d_forward.1} parent=55 // pred_check
        %p792 = pneg %p194
      $region58: #{tcnn1d_forward.1} parent=55 // pred_check_branch
        %794 = sbr.rel (%p792) target = $region60
      $region59: #{tcnn1d_forward.1} parent=55 // pred_region
        %p795 = scmp.lt.s32.totalorder %s19, 1
        %s796 = scalar_select %p795, %s19, 1
        %s797 = smul.addr %s796, 4
        %s798 = scalar_lea.vmem %s7, %s797
      $region60: #{tcnn1d_forward.1} parent=55 // pred_fallthru
        _
    $region56: #{tcnn1d_forward.1} parent=5 // pred_fallthru
      _
  $region6: #{tcnn1d_forward.1} parent=0 // loop_footer
    %s17 = sadd.s32 1, %s13
  $region7: #{tcnn1d_forward.1} parent=0 // loop_footer_branch
    %12 = sbr.rel target = $region3
  $region8: #{tcnn1d_forward.1} parent=0 // loop_exit
    _

</llo_original>
